<compile_context>
chip_gen: v7x
topology: tpu7x:2x2x1
jax: 0.10.0
libtpu: 0.0.40
codegen_flags: <defaults>
</compile_context>

<pallas_src>
import functools
import math

import jax
import jax.numpy as jnp
from jax import lax
from jax.experimental import pallas as pl
from jax.experimental.pallas import tpu as pltpu

_MXU_DTYPE = jnp.bfloat16
_NEG_LARGE = -1e30                    # finite mask value (no exp(-inf - -inf) NaN)


def _vmem_limit_bytes():
    """~75% of physical VMEM: ~96 MiB on 128 MiB parts (v5e/v6e), 48 MiB on v7x."""
    try:
        cap = int(pltpu.get_tpu_info().vmem_capacity_bytes)
    except Exception:
        cap = 64 * 1024 * 1024        # conservative fallback (v7x-sized)
    return min((cap * 3) // 4, 100 * 1024 * 1024)


def _pick_tile(n, cap, align):
    """Largest divisor of n that is <= cap and a multiple of `align` (else n).
    TODO(synk): pad instead of falling back to the full dim when n has no
    aligned divisor <= cap (e.g. prime n), so a single huge block can't blow VMEM."""
    if n <= cap:
        return n
    t = cap - (cap % align)
    while t >= align:
        if n % t == 0:
            return t
        t -= align
    return n


# ----------------------------- Pallas kernels ------------------------------

def _matmul_kernel(x_ref, w_ref, o_ref, acc_ref):
    """Tiled matmul with K-axis (grid axis 2) accumulation; bf16 MXU, f32 acc."""
    @pl.when(pl.program_id(2) == 0)
    def _():
        acc_ref[...] = jnp.zeros_like(acc_ref)

    acc_ref[...] += jnp.dot(x_ref[...].astype(_MXU_DTYPE),
                            w_ref[...].astype(_MXU_DTYPE),
                            preferred_element_type=jnp.float32)

    @pl.when(pl.program_id(2) == pl.num_programs(2) - 1)
    def _():
        o_ref[...] = acc_ref[...].astype(o_ref.dtype)


def _out_proj_kernel(a_ref, w_ref, o_ref, acc_ref):
    """Output projection; the head axis (grid axis 3) is a reduction axis, so
    the (bs, H, S, hd) attention output never needs an HBM transpose."""
    h = pl.program_id(3)

    @pl.when(h == 0)
    def _():
        acc_ref[...] = jnp.zeros_like(acc_ref)

    a = a_ref[0, 0]                                        # (Ts, hd) bf16
    acc_ref[...] += jnp.dot(a, w_ref[...],                 # (hd, Tn) bf16
                            preferred_element_type=jnp.float32)

    @pl.when(h == pl.num_programs(3) - 1)
    def _():
        o_ref[0] = acc_ref[...].astype(o_ref.dtype)


def _flash_attn_kernel(q_ref, k_ref, v_ref, o_ref, m_scr, l_scr, acc_scr,
                       *, n_rep, tq, tk):
    """Online-softmax causal GQA attention for one (batch, kv_group, q_tile)
    across the kv_tile grid axis (axis 3, 'arbitrary').  Q/K arrive pre-rotated
    (rotary already applied) and Q pre-scaled by 1/sqrt(hd), so each kv step is
    exactly: one hd-deep QK^T, (mask on diagonal tiles only), online-softmax
    update, one PV matmul."""
    qblk = pl.program_id(2)
    kblk = pl.program_id(3)
    hd = q_ref.shape[-1]
    mrows = n_rep * tq

    first_q = qblk * tq
    first_k = kblk * tk
    last_q = first_q + (tq - 1)
    last_k = first_k + (tk - 1)

    @pl.when(kblk == 0)
    def _():
        m_scr[...] = jnp.full_like(m_scr, _NEG_LARGE)
        l_scr[...] = jnp.zeros_like(l_scr)
        acc_scr[...] = jnp.zeros_like(acc_scr)

    def update(apply_mask):
        q = q_ref[0].reshape(mrows, hd)                    # bf16, VMEM-resident
        k = k_ref[0, 0]                                    # (Tk, hd) bf16
        s = lax.dot_general(q, k, (((1,), (1,)), ((), ())),
                            preferred_element_type=jnp.float32)  # (mrows, Tk)

        if apply_mask:
            # Narrow iotas; rows are (head, pos) merged: pos = row % tq.
            rows = lax.broadcasted_iota(jnp.int32, (mrows, 1), 0)
            cols = lax.broadcasted_iota(jnp.int32, (1, tk), 1)
            pos_q = first_q + rows % tq
            pos_k = first_k + cols
            s = jnp.where(pos_k <= pos_q, s, _NEG_LARGE)

        m_prev = m_scr[...]                                # (mrows, 1)
        m_new = jnp.maximum(m_prev, jnp.max(s, axis=-1, keepdims=True))
        alpha = jnp.exp(m_prev - m_new)
        p = jnp.exp(s - m_new)
        l_scr[...] = alpha * l_scr[...] + jnp.sum(p, axis=-1, keepdims=True)
        acc_scr[...] = alpha * acc_scr[...] + lax.dot_general(
            p.astype(_MXU_DTYPE), v_ref[0, 0], (((1,), (0,)), ((), ())),
            preferred_element_type=jnp.float32)
        m_scr[...] = m_new

    fully_visible = last_k <= first_q                      # below diag: no mask
    crosses_diag = jnp.logical_and(first_k <= last_q,
                                   jnp.logical_not(fully_visible))

    @pl.when(crosses_diag)          # only diagonal-crossing tiles pay for mask
    def _():
        update(apply_mask=True)

    @pl.when(fully_visible)         # fully visible tiles: no iota / where work
    def _():
        update(apply_mask=False)

    @pl.when(kblk == pl.num_programs(3) - 1)
    def _():
        inv_l = pl.reciprocal(l_scr[...], approx=True)
        out = acc_scr[...] * inv_l                         # (mrows, hd)
        o_ref[0] = out.reshape(n_rep, tq, hd).astype(o_ref.dtype)


# --------------------------- weight preparation -----------------------------

def prepare_attention_weights(wq, wk, wv, wo, n_heads, n_kv_heads):
    """One-time (outside the per-call path) weight fusion / permutation:
    - permute wq/wk output rows so Q/K come out already rotary-de-interleaved
      ([even features | odd features] == [real half | imag half]),
    - fuse wq/wk/wv into one transposed weight for a single wide matmul,
    - transpose wo once,
    - store both fused weights in bf16 (MXU-native, half the weight DMA)."""
    out_features, dim = wq.shape
    hd = out_features // n_heads
    perm = jnp.concatenate([jnp.arange(0, hd, 2), jnp.arange(1, hd, 2)])

    def permute_rows(w, nh):
        return w.reshape(nh, hd, dim)[:, perm, :].reshape(nh * hd, dim)

    w_qkv_t = jnp.concatenate(
        [permute_rows(wq, n_heads), permute_rows(wk, n_kv_heads), wv],
        axis=0).T.astype(_MXU_DTYPE)
    wo_t = wo.T.astype(_MXU_DTYPE)                         # (H*hd, dim)
    return w_qkv_t, wo_t


# ------------------------------- wrapper ------------------------------------

def attention_pallas(x, cos, sin, w_qkv_t, wo_t, n_heads, n_kv_heads):
    bs, S, dim = x.shape
    hd = dim // n_heads
    dh = hd // 2
    n_rep = n_heads // n_kv_heads
    n_q = n_heads * hd
    n_kv = n_kv_heads * hd
    n_tot = w_qkv_t.shape[1]
    vmem_limit = _vmem_limit_bytes()

    # ---------------- fused, tiled QKV projection (bf16 MXU, bf16 out) ------
    M = bs * S
    x2d = x.reshape(M, dim)
    tm = _pick_tile(M, 512, 8)
    tn = _pick_tile(n_tot, 512, 128)
    tkk = _pick_tile(dim, 512, 128)

    qkv2d = pl.pallas_call(
        _matmul_kernel,
        out_shape=jax.ShapeDtypeStruct((M, n_tot), _MXU_DTYPE),
        grid=(M // tm, n_tot // tn, dim // tkk),
        in_specs=[pl.BlockSpec((tm, tkk), lambda i, j, k: (i, k)),
                  pl.BlockSpec((tkk, tn), lambda i, j, k: (k, j))],
        out_specs=pl.BlockSpec((tm, tn), lambda i, j, k: (i, j)),
        scratch_shapes=[pltpu.VMEM((tm, tn), jnp.float32)],
        compiler_params=pltpu.CompilerParams(
            dimension_semantics=("parallel", "parallel", "arbitrary"),
            vmem_limit_bytes=vmem_limit),
    )(x2d, w_qkv_t)

    # -------- layout glue + rotary (fused by XLA into the transpose pass) ----
    # Q/K are already [real half | imag half] thanks to the weight-row
    # permutation, so the rotation + 1/sqrt(hd) score scale ride the transpose
    # pass we need anyway.  The flash kernel therefore does no rope at all.
    qkv = qkv2d.reshape(bs, S, n_tot)
    scale = 1.0 / math.sqrt(hd)
    c = cos[None, :, None, :].astype(jnp.float32)          # (1, S, 1, dh)
    sn = sin[None, :, None, :].astype(jnp.float32)

    def rope(t, extra_scale):
        tf = t.astype(jnp.float32)
        tr, ti = tf[..., :dh], tf[..., dh:]
        return jnp.concatenate([(tr * c - ti * sn) * extra_scale,
                                (tr * sn + ti * c) * extra_scale], axis=-1)

    q4 = qkv[..., :n_q].reshape(bs, S, n_heads, hd)
    k4 = qkv[..., n_q:n_q + n_kv].reshape(bs, S, n_kv_heads, hd)
    v4 = qkv[..., n_q + n_kv:].reshape(bs, S, n_kv_heads, hd)
    qh = rope(q4, scale).astype(_MXU_DTYPE).transpose(0, 2, 1, 3)   # (bs,H,S,hd)
    kh = rope(k4, 1.0).astype(_MXU_DTYPE).transpose(0, 2, 1, 3)     # (bs,Hkv,S,hd)
    vh = v4.transpose(0, 2, 1, 3)                                   # bf16
    # TODO(synk): fold this transpose into the QKV kernel's out BlockSpec once
    # sub-128-lane per-head column blocks are viable for small head_dim.

    # ---------------- flash GQA attention -----------------------------------
    # Cap mrows = n_rep * tq so the f32 (mrows, tkv) score/prob temporaries and
    # the acc scratch stay well inside v7x's 64 MiB VMEM.
    tq = _pick_tile(S, max(64, 512 // n_rep), 8)
    tkv = _pick_tile(S, 256, 8)
    mrows = n_rep * tq

    def kv_index_map(b, g, qi, ki):
        # Clamp past-diagonal kv blocks to the last visible block so no new DMA
        # is issued for compute-skipped (fully masked) causal tiles.
        last_visible = (qi * tq + (tq - 1)) // tkv
        return (b, g, jnp.minimum(ki, last_visible), 0)

    kernel = functools.partial(_flash_attn_kernel, n_rep=n_rep, tq=tq, tk=tkv)

    attn = pl.pallas_call(
        kernel,
        out_shape=jax.ShapeDtypeStruct((bs, n_heads, S, hd), _MXU_DTYPE),
        grid=(bs, n_kv_heads, S // tq, S // tkv),
        in_specs=[
            pl.BlockSpec((1, n_rep, tq, hd), lambda b, g, qi, ki: (b, g, qi, 0)),
            pl.BlockSpec((1, 1, tkv, hd), kv_index_map),
            pl.BlockSpec((1, 1, tkv, hd), kv_index_map),
        ],
        out_specs=pl.BlockSpec((1, n_rep, tq, hd),
                               lambda b, g, qi, ki: (b, g, qi, 0)),
        scratch_shapes=[pltpu.VMEM((mrows, 1), jnp.float32),
                        pltpu.VMEM((mrows, 1), jnp.float32),
                        pltpu.VMEM((mrows, hd), jnp.float32)],
        compiler_params=pltpu.CompilerParams(
            dimension_semantics=("parallel", "parallel", "parallel", "arbitrary"),
            vmem_limit_bytes=vmem_limit),
    )(qh, kh, vh)

    # ---------------- output projection (head axis folded as reduction) -----
    ts = _pick_tile(S, 256, 8)
    tno = _pick_tile(dim, 512, 128)

    out = pl.pallas_call(
        _out_proj_kernel,
        out_shape=jax.ShapeDtypeStruct((bs, S, dim), x.dtype),
        grid=(bs, S // ts, dim // tno, n_heads),
        in_specs=[pl.BlockSpec((1, 1, ts, hd), lambda b, si, ni, h: (b, h, si, 0)),
                  pl.BlockSpec((hd, tno), lambda b, si, ni, h: (h, ni))],
        out_specs=pl.BlockSpec((1, ts, tno), lambda b, si, ni, h: (b, si, ni)),
        scratch_shapes=[pltpu.VMEM((ts, tno), jnp.float32)],
        compiler_params=pltpu.CompilerParams(
            dimension_semantics=("parallel", "parallel", "parallel", "arbitrary"),
            vmem_limit_bytes=vmem_limit),
    )(attn, wo_t)

    return out


# --------------------------- pure-JAX reference ------------------------------

def attention_reference(x, cos, sin, wq, wk, wv, wo, n_heads, n_kv_heads):
    bs, S, dim = x.shape
    hd = dim // n_heads
    n_rep = n_heads // n_kv_heads

    xq = (x @ wq.T).reshape(bs, S, n_heads, hd)
    xk = (x @ wk.T).reshape(bs, S, n_kv_heads, hd)
    xv = (x @ wv.T).reshape(bs, S, n_kv_heads, hd)

    def rope(t):  # interleaved (torch view_as_complex) convention
        tr = t[..., 0::2]
        ti = t[..., 1::2]
        c = cos[None, :, None, :]
        s = sin[None, :, None, :]
        outr = tr * c - ti * s
        outi = tr * s + ti * c
        return jnp.stack([outr, outi], axis=-1).reshape(t.shape)

    xq = rope(xq)
    xk = rope(xk)
    keys = jnp.repeat(xk, n_rep, axis=2)
    vals = jnp.repeat(xv, n_rep, axis=2)

    q = jnp.transpose(xq, (0, 2, 1, 3))
    k = jnp.transpose(keys, (0, 2, 1, 3))
    v = jnp.transpose(vals, (0, 2, 1, 3))

    scores = jnp.einsum("bhqd,bhkd->bhqk", q, k) / math.sqrt(hd)
    mask = jnp.tril(jnp.ones((S, S), dtype=bool))
    scores = jnp.where(mask, scores, -jnp.inf)
    probs = jax.nn.softmax(scores, axis=-1)
    o = jnp.einsum("bhqk,bhkd->bhqd", probs, v)
    o = jnp.transpose(o, (0, 2, 1, 3)).reshape(bs, S, n_heads * hd)
    return o @ wo.T


# --------------------------------- main --------------------------------------

if __name__ == "__main__":
    bs, seqlen, dim = 2, 8, 32
    n_heads, n_kv_heads = 4, 2
    head_dim = dim // n_heads

    key = jax.random.PRNGKey(0)
    kx, kq, kk, kv, ko = jax.random.split(key, 5)

    x = jax.random.normal(kx, (bs, seqlen, dim), dtype=jnp.float32)

    def trunc(k, shape, std):
        return jax.random.truncated_normal(k, -2.0, 2.0, shape, jnp.float32) * std

    wq = trunc(kq, (n_heads * head_dim, dim), 0.02)
    wk = trunc(kk, (n_kv_heads * head_dim, dim), 0.02)
    wv = trunc(kv, (n_kv_heads * head_dim, dim), 0.02)
    wo = trunc(ko, (dim, n_heads * head_dim), 0.02)

    # Precomputed rotary frequencies (llama-style, theta=10000), as cos/sin.
    theta = 10000.0
    freqs = 1.0 / (theta ** (jnp.arange(0, head_dim, 2, dtype=jnp.float32) / head_dim))
    angles = jnp.outer(jnp.arange(seqlen, dtype=jnp.float32), freqs)  # (S, hd//2)
    cos = jnp.cos(angles)
    sin = jnp.sin(angles)

    # One-time weight prep (fusion + rotary de-interleave permutation + bf16).
    w_qkv_t, wo_t = prepare_attention_weights(wq, wk, wv, wo, n_heads, n_kv_heads)

    out = attention_pallas(x, cos, sin, w_qkv_t, wo_t, n_heads, n_kv_heads)
    out = jax.block_until_ready(out)

    ref = attention_reference(x, cos, sin, wq, wk, wv, wo, n_heads, n_kv_heads)
    assert out.shape == (bs, seqlen, dim)
    assert jnp.allclose(out, ref, atol=5e-3, rtol=5e-3), "mismatch vs reference"

    print("KERNEL_OK")
</pallas_src>

<mosaic_0001>
module attributes {stable_mosaic.version = 11 : i64} {
  func.func @_matmul_kernel(%arg0: i32, %arg1: i32, %arg2: i32, %arg3: memref<16x32xf32, #tpu.memory_space<vmem>>, %arg4: memref<32x64xbf16, #tpu.memory_space<vmem>>, %arg5: memref<16x64xbf16, #tpu.memory_space<vmem>>, %arg6: memref<16x64xf32, #tpu.memory_space<vmem>>) attributes {dimension_semantics = [#tpu.dimension_semantics<parallel>, #tpu.dimension_semantics<parallel>, #tpu.dimension_semantics<arbitrary>], iteration_bounds = array<i64: 1, 1, 1>, scalar_prefetch = 0 : i64, scratch_operands = 1 : i64, tpu.core_type = #tpu.core_type<tc>, window_params = [{transform_indices = @transform_0, window_bounds = array<i64: 16, 32>}, {transform_indices = @transform_1, window_bounds = array<i64: 32, 64>}, {transform_indices = @transform_2, window_bounds = array<i64: 16, 64>}]} {
    %c0_i32 = arith.constant 0 : i32
    %0 = arith.cmpi eq, %arg2, %c0_i32 : i32
    %1 = arith.extui %0 : i1 to i32
    %c0_i32_0 = arith.constant 0 : i32
    %2 = arith.cmpi ne, %1, %c0_i32_0 : i32
    scf.if %2 {
      %cst_10 = arith.constant 0.000000e+00 : f32
      %13 = vector.broadcast %cst_10 : f32 to vector<16x64xf32>
      %c0_11 = arith.constant 0 : index
      %c0_12 = arith.constant 0 : index
      %14 = vector.load %arg6[%c0_11, %c0_12] : memref<16x64xf32, #tpu.memory_space<vmem>>, vector<16x64xf32>
      tpu.vector_store %arg6[%c0_11, %c0_12], %13 {strides = array<i32>} : memref<16x64xf32, #tpu.memory_space<vmem>>, vector<16x64xf32>,
    } else {
    }
    %c0 = arith.constant 0 : index
    %c0_1 = arith.constant 0 : index
    %3 = vector.load %arg6[%c0, %c0_1] : memref<16x64xf32, #tpu.memory_space<vmem>>, vector<16x64xf32>
    %c0_2 = arith.constant 0 : index
    %c0_3 = arith.constant 0 : index
    %4 = vector.load %arg3[%c0_2, %c0_3] : memref<16x32xf32, #tpu.memory_space<vmem>>, vector<16x32xf32>
    %5 = arith.truncf %4 : vector<16x32xf32> to vector<16x32xbf16>
    %c0_4 = arith.constant 0 : index
    %c0_5 = arith.constant 0 : index
    %6 = vector.load %arg4[%c0_4, %c0_5] : memref<32x64xbf16, #tpu.memory_space<vmem>>, vector<32x64xbf16>
    %cst = arith.constant dense<0.000000e+00> : vector<16x64xf32>
    %7 = tpu.matmul %5, %6, %cst {dimension_numbers = #tpu.dot_dimension_numbers<[1], [0], [0], [1], [0, 0, 1, 1], [], []>} : vector<16x32xbf16>, vector<32x64xbf16>, vector<16x64xf32> -> vector<16x64xf32>
    %8 = arith.addf %3, %7 : vector<16x64xf32>
    %c0_6 = arith.constant 0 : index
    %c0_7 = arith.constant 0 : index
    %9 = vector.load %arg6[%c0_6, %c0_7] : memref<16x64xf32, #tpu.memory_space<vmem>>, vector<16x64xf32>
    tpu.vector_store %arg6[%c0_6, %c0_7], %8 {strides = array<i32>} : memref<16x64xf32, #tpu.memory_space<vmem>>, vector<16x64xf32>,
    %c0_i32_8 = arith.constant 0 : i32
    %10 = arith.cmpi eq, %arg2, %c0_i32_8 : i32
    %11 = arith.extui %10 : i1 to i32
    %c0_i32_9 = arith.constant 0 : i32
    %12 = arith.cmpi ne, %11, %c0_i32_9 : i32
    scf.if %12 {
      %c0_10 = arith.constant 0 : index
      %c0_11 = arith.constant 0 : index
      %13 = vector.load %arg6[%c0_10, %c0_11] : memref<16x64xf32, #tpu.memory_space<vmem>>, vector<16x64xf32>
      %14 = arith.truncf %13 : vector<16x64xf32> to vector<16x64xbf16>
      %c0_12 = arith.constant 0 : index
      %c0_13 = arith.constant 0 : index
      %15 = vector.load %arg5[%c0_12, %c0_13] : memref<16x64xbf16, #tpu.memory_space<vmem>>, vector<16x64xbf16>
      tpu.vector_store %arg5[%c0_12, %c0_13], %14 {strides = array<i32>} : memref<16x64xbf16, #tpu.memory_space<vmem>>, vector<16x64xbf16>,
    } else {
    }
    return
  }
  func.func @transform_0(%arg0: i32, %arg1: i32, %arg2: i32) -> (i32, i32) {
    %c0_i32 = arith.constant 0 : i32
    return %arg0, %arg2 : i32, i32
  }
  func.func @transform_1(%arg0: i32, %arg1: i32, %arg2: i32) -> (i32, i32) {
    %c0_i32 = arith.constant 0 : i32
    return %arg2, %arg1 : i32, i32
  }
  func.func @transform_2(%arg0: i32, %arg1: i32, %arg2: i32) -> (i32, i32) {
    %c0_i32 = arith.constant 0 : i32
    return %arg0, %arg1 : i32, i32
  }
}

</mosaic_0001>

<llo_original>
// kernel: tpu_custom_call.1
$region0: #{tpu_custom_call.1}
  #allocation0 [shape = 'u32[]', space=smem, size = 0x4, offset = 0x4, fixed_abs, tag = 'smem constant byte address 0x4 - core index']
  #allocation1 [shape = 'u32[144,128]{1,0:T(1,128)}', space=vmem, size = 0x12000, scoped, tag = 'internal scratch']
  #allocation2 [shape = 'f32[16,64]{1,0:T(8,128)}', space=vmem, size = 0x2000, scoped, tag = 'scratch operand']
  %s0 = inlined_call_operand.hbm [shape: f32[16,32], index: 0, kind: input, shape index: {}]
  %s1 = inlined_call_operand.hbm [shape: bf16[32,64], index: 1, kind: input, shape index: {}]
  %s2 = inlined_call_operand.hbm [shape: bf16[16,64], index: 2, kind: output, shape index: {}]
  %s3 = sld [smem:[#allocation0]]
  $region34: #{tpu_custom_call.1} parent=0
    _
  %s5 = ssub.s32 1, %s3
  %s6 = scalar_select 0, %s5, %s3
  $region1: #{tpu_custom_call.1} parent=0
    #allocation3 [shape = 'u8[8192]{0}', space=vmem, size = 0x2000, scoped, tag = 'input window, operand 0, single buffered']
    #allocation4 [shape = 's32[1]{0}', space=sflag, size = 0x4, scoped, tag = 'scoped memory for tpu_custom_call.1']
    #allocation5 [shape = 's32[1]{0}', space=sflag, size = 0x4, scoped, tag = 'scoped memory for tpu_custom_call.1']
    #allocation6 [shape = 'u8[8192]{0}', space=vmem, size = 0x2000, scoped, tag = 'input window, operand 1, single buffered']
    #allocation7 [shape = 's32[1]{0}', space=sflag, size = 0x4, scoped, tag = 'scoped memory for tpu_custom_call.1']
    #allocation8 [shape = 'u8[4096]{0}', space=vmem, size = 0x1000, scoped, tag = 'output window, operand 0, single buffered']
    %7 = vsyncpa [#allocation4], 0
    %8 = vsyncpa [#allocation7], 0
    %9 = vsyncpa [#allocation5], 0
    // Predicated region
    $region2: #{tpu_custom_call.1} parent=1 // pred_check
      _
    $region3: #{tpu_custom_call.1} parent=1 // pred_check_branch
      %11 = sbr.rel (0) target = $region5
    $region4: #{tpu_custom_call.1} parent=1 // pred_region
      %s13 = ssub.s32 256, 256
      %14 = vsyncadd [#allocation4], %s13
      %s15 = sshll.u32 [#allocation3], 4
      %s16 = int_to_ptr.vmem [resolvable:$true] %s15
      %21 = dma.hbm_to_vmem [thread:$0]  %s0, 256, %s16, [#allocation4], 128, 128, 8
    $region5: #{tpu_custom_call.1} parent=1 // pred_fallthru
      _
    // Predicated region
    $region6: #{tpu_custom_call.1} parent=1 // pred_check
      _
    $region7: #{tpu_custom_call.1} parent=1 // pred_check_branch
      %23 = sbr.rel (0) target = $region9
    $region8: #{tpu_custom_call.1} parent=1 // pred_region
      %s25 = ssub.s32 256, 256
      %26 = vsyncadd [#allocation7], %s25
      %s27 = sshll.u32 [#allocation6], 4
      %s28 = int_to_ptr.vmem [resolvable:$true] %s27
      %33 = dma.hbm_to_vmem [thread:$0]  %s1, 256, %s28, [#allocation7], 64, 64, 4
    $region9: #{tpu_custom_call.1} parent=1 // pred_fallthru
      _
    // Predicated region
    $region10: #{tpu_custom_call.1} parent=1 // pred_check
      _
    $region11: #{tpu_custom_call.1} parent=1 // pred_check_branch
      %35 = sbr.rel (0) target = $region13
    $region12: #{tpu_custom_call.1} parent=1 // pred_region
      %36 = dma.done [#allocation4], 256
    $region13: #{tpu_custom_call.1} parent=1 // pred_fallthru
      _
    // Predicated region
    $region14: #{tpu_custom_call.1} parent=1 // pred_check
      _
    $region15: #{tpu_custom_call.1} parent=1 // pred_check_branch
      %38 = sbr.rel (0) target = $region17
    $region16: #{tpu_custom_call.1} parent=1 // pred_region
      %39 = dma.done [#allocation7], 256
    $region17: #{tpu_custom_call.1} parent=1 // pred_fallthru
      _
    %p41 = scmp.eq.s32.totalorder 0, 0
    // Predicated region
    $region18: #{tpu_custom_call.1} parent=1 // pred_check
      %p42 = pneg %p41
    $region19: #{tpu_custom_call.1} parent=1 // pred_check_branch
      %44 = sbr.rel (%p42) target = $region21
    $region20: #{tpu_custom_call.1} parent=1 // pred_region
      %vm45 = vcmask 523264
      %46 = vst.msk [vmem:[#allocation2] sm:$0xff] %vm45, 0.0
      %47 = vst.msk [vmem:[#allocation2 + $0x8] sm:$0xff] %vm45, 0.0
    $region21: #{tpu_custom_call.1} parent=1 // pred_fallthru
      _
    %v48 = vld [vmem:[#allocation2] sm:$0xff]
    %v49 = vld [vmem:[#allocation2 + $0x8] sm:$0xff]
    %v50 = vld [vmem:[#allocation3] sm:$0xff]
    %v51 = vld [vmem:[#allocation3 + $0x8] sm:$0xff]
    %v52 = vpack.c.bf16 %v51, %v50
    %v53 = vld [vmem:[#allocation6] sm:$0xf]
    %v54 = vld [vmem:[#allocation6 + $0x4] sm:$0xf]
    %v55 = vld [vmem:[#allocation6 + $0x8] sm:$0xf]
    %v56 = vld [vmem:[#allocation6 + $0xc] sm:$0xf]
    %v61 = vunpack.c.l.b16 %v53
    %v62 = vunpack.c.l.b16 %v54
    %v63 = vunpack.c.l.b16 %v55
    %v64 = vunpack.c.l.b16 %v56
    %v65 = vpack.c.b16 %v62, %v61
    %v66 = vpack.c.b16 %v64, %v63
    %vm69 = vcmask 261120
    %v71 = vsel %vm69, %v52, 0
    %73 = vmatprep.subr.bf16.mxu0 0
    %74 = vmatpush1.bf16.msra.mxu0 %v65
    %75 = vmatprep.subr.bf16.mxu0 0
    %76 = vmatpush1.bf16.msra.mxu0 %v66
    %77 = vmatprep.subr.bf16.mxu0 0
    %78 = vmatpush1.bf16.msra.mxu0 0
    %79 = vmatprep.subr.bf16.mxu0 0
    %80 = vmatpush1.bf16.msra.mxu0 0
    %81 = vmatprep.subr.bf16.mxu0 0
    %82 = vmatpush1.bf16.msra.mxu0 0
    %83 = vmatprep.subr.bf16.mxu0 0
    %84 = vmatpush1.bf16.msra.mxu0 0
    %85 = vmatprep.subr.bf16.mxu0 0
    %86 = vmatpush1.bf16.msra.mxu0 0
    %87 = vmatprep.subr.bf16.mxu0 0
    %88 = vmatpush1.bf16.msra.mxu0 0
    %89 = vmatprep.subr.bf16.mxu0 0
    %90 = vmatpush1.bf16.msra.mxu0 0
    %91 = vmatprep.subr.bf16.mxu0 0
    %92 = vmatpush1.bf16.msra.mxu0 0
    %93 = vmatprep.subr.bf16.mxu0 0
    %94 = vmatpush1.bf16.msra.mxu0 0
    %95 = vmatprep.subr.bf16.mxu0 0
    %96 = vmatpush1.bf16.msra.mxu0 0
    %97 = vmatprep.subr.bf16.mxu0 0
    %98 = vmatpush1.bf16.msra.mxu0 0
    %99 = vmatprep.subr.bf16.mxu0 0
    %100 = vmatpush1.bf16.msra.mxu0 0
    %101 = vmatprep.subr.bf16.mxu0 0
    %102 = vmatpush1.bf16.msra.mxu0 0
    %103 = vmatprep.subr.bf16.mxu0 0
    %104 = vmatpush1.bf16.msra.mxu0 0
    %105 = vmatprep.mubr.bf16.mxu0 0
    %106 = vmatmul.mubr.bf16.gmra.mrb[0].mxu0 %v71
    %v107 = vpop.f32.mrb[0].mxu0
    %v108 = vadd.f32 0.0, %v107
    %v109 = vpop.f32.mrb[0].mxu0
    %v110 = vpop.f32.mrb[0].mxu0
    %v111 = vadd.f32 0.0, %v110
    %v112 = vpop.f32.mrb[0].mxu0
    %113 = vdwg.mxu0
    %v114 = vadd.f32 %v48, %v108
    %v115 = vadd.f32 %v49, %v111
    %vm116 = vcmask 523264
    %117 = vst.msk [vmem:[#allocation2] sm:$0xff] %vm116, %v114
    %118 = vst.msk [vmem:[#allocation2 + $0x8] sm:$0xff] %vm116, %v115
    // Predicated region
    $region22: #{tpu_custom_call.1} parent=1 // pred_check
      %p119 = pneg %p41
    $region23: #{tpu_custom_call.1} parent=1 // pred_check_branch
      %121 = sbr.rel (%p119) target = $region25
    $region24: #{tpu_custom_call.1} parent=1 // pred_region
      %v122 = vld [vmem:[#allocation2] sm:$0xff]
      %v123 = vld [vmem:[#allocation2 + $0x8] sm:$0xff]
      %v124 = vpack.c.bf16 %v123, %v122
      %v126 = vunpack.c.l.b16 %v124
      %v127 = vunpack.c.h.b16 %v124
      %v128 = vpack.c.b16 %v126, %v126
      %v129 = vpack.c.b16 %v127, %v127
      %vm132 = vcmask 519168
      %133 = vst.msk [vmem:[#allocation8] sm:$0xf] %vm132, %v128
      %134 = vst.msk [vmem:[#allocation8 + $0x4] sm:$0xf] %vm132, %v129
    $region25: #{tpu_custom_call.1} parent=1 // pred_fallthru
      _
    // Predicated region
    $region26: #{tpu_custom_call.1} parent=1 // pred_check
      _
    $region27: #{tpu_custom_call.1} parent=1 // pred_check_branch
      %136 = sbr.rel (0) target = $region29
    $region28: #{tpu_custom_call.1} parent=1 // pred_region
      %s138 = ssub.s32 128, 128
      %139 = vsyncadd [#allocation5], %s138
      %s140 = sshll.u32 [#allocation8], 4
      %s141 = int_to_ptr.vmem [resolvable:$true] %s140
      %146 = dma.vmem_to_hbm [thread:$0]  %s141, 128, %s2, [#allocation5], 64, 64, 4
    $region29: #{tpu_custom_call.1} parent=1 // pred_fallthru
      _
    // Predicated region
    $region30: #{tpu_custom_call.1} parent=1 // pred_check
      _
    $region31: #{tpu_custom_call.1} parent=1 // pred_check_branch
      %148 = sbr.rel (0) target = $region33
    $region32: #{tpu_custom_call.1} parent=1 // pred_region
      %149 = dma.done [#allocation5], 128
    $region33: #{tpu_custom_call.1} parent=1 // pred_fallthru
      _
    %150 = vsyncpa [#allocation4], 1
    %151 = vsyncpa [#allocation7], 1
    %152 = vsyncpa [#allocation5], 1

</llo_original>
